<compile_context>
chip_gen: v7x
topology: tpu7x:2x2x1
jax: 0.10.0
libtpu: 0.0.40
codegen_flags: <defaults>
</compile_context>

<pallas_src>
import functools

import jax
import jax.numpy as jnp
from jax import lax
from jax.experimental import pallas as pl
from jax.experimental.pallas import tpu as pltpu

F_IN = 10            # nn.Linear(10, 10)
GROUP = 16           # lanes reserved per batch element (10 features + 6 zero pad)
PACK = 128 // GROUP  # 8 batch elements packed per 128-lane row
LANES = 128


def _dynamic_net_kernel(x_ref, wt_ref, b_ref, o_ref, *, iterations):
    """h <- tanh(h @ W_blockdiag + b), `iterations` times, operands VMEM/vreg resident."""
    h = x_ref[...].astype(jnp.float32)        # (tile_rows, 128) packed batch
    wt = wt_ref[...].astype(jnp.float32)      # (128, 128) block-diagonal weight
    b = b_ref[...].astype(jnp.float32)        # (1, 128) -- VPU broadcasts per row

    def step(hh):
        return jnp.tanh(jnp.dot(hh, wt, preferred_element_type=jnp.float32) + b)

    if iterations <= 8:
        # Small static count: full unroll so LLO can interleave MXU / VPU / EUP.
        for _ in range(iterations):
            h = step(h)
    else:
        # Large count: bounded unroll keeps instruction footprint / compile time sane.
        h = lax.fori_loop(0, iterations, lambda _, hh: step(hh), h, unroll=4)

    o_ref[...] = h.astype(o_ref.dtype)


def dynamic_net_forward(x, weight, bias, iterations, *, tile_rows=128):
    """x: (B, 10); weight: (out, in) = (10, 10); bias: (10,).

    `iterations` is a static Python int (mirrors the PyTorch host-side loop);
    each distinct value compiles a fresh kernel.
    """
    B, feat = x.shape
    assert feat == F_IN and weight.shape == (F_IN, F_IN) and bias.shape == (F_IN,)
    iterations = int(iterations)
    dtype = x.dtype

    # ---- block-diagonal packed weight / bias (exact: off-diagonal blocks are 0) ----
    block = jnp.zeros((GROUP, GROUP), dtype).at[:F_IN, :F_IN].set(weight.T)
    w_packed = jnp.kron(jnp.eye(PACK, dtype=dtype), block)                 # (128, 128)
    b_packed = jnp.tile(
        jnp.zeros((GROUP,), dtype).at[:F_IN].set(bias), PACK
    ).reshape(1, LANES)                                                    # (1, 128)

    # ---- batch packing: 8 elements per 128-lane row, rows tiled over the grid ----
    rows = -(-B // PACK)                 # packed rows needed
    rows8 = -(-rows // 8) * 8            # round up to sublane multiple
    tr = min(int(tile_rows), rows8)
    if rows8 > 8:                        # guarantee >=2 grid tiles (v7x second TC)
        half = -(-rows8 // 2)
        half = -(-half // 8) * 8
        tr = min(tr, half)
    tr = max(8, (tr // 8) * 8)
    rows_total = -(-rows8 // tr) * tr
    slots = rows_total * PACK

    x_slots = jnp.zeros((slots, GROUP), dtype).at[:B, :F_IN].set(x)
    x_packed = x_slots.reshape(rows_total, LANES)

    kernel = functools.partial(_dynamic_net_kernel, iterations=iterations)

    out_packed = pl.pallas_call(
        kernel,
        out_shape=jax.ShapeDtypeStruct((rows_total, LANES), dtype),
        grid=(rows_total // tr,),
        in_specs=[
            pl.BlockSpec((tr, LANES), lambda i: (i, 0)),      # packed activations
            pl.BlockSpec((LANES, LANES), lambda i: (0, 0)),   # block-diag weight (replicated)
            pl.BlockSpec((1, LANES), lambda i: (0, 0)),       # packed bias (replicated)
        ],
        out_specs=pl.BlockSpec((tr, LANES), lambda i: (i, 0)),
        compiler_params=pltpu.CompilerParams(
            dimension_semantics=("parallel",),                # shard batch tiles across TCs
        ),
    )(x_packed, w_packed, b_packed)

    return out_packed.reshape(slots, GROUP)[:B, :F_IN]


def _reference(x, weight, bias, iterations):
    h = x
    for _ in range(iterations):
        h = jnp.tanh(h @ weight.T + bias)
    return h


if __name__ == "__main__":
    key = jax.random.PRNGKey(0)
    k_x, k_w, k_b = jax.random.split(key, 3)

    batch, feat = 8, 10
    iterations = 5

    x = jax.random.normal(k_x, (batch, feat), dtype=jnp.float32)
    # Deterministic init mimicking nn.Linear's uniform(-1/sqrt(in), 1/sqrt(in)).
    bound = 1.0 / jnp.sqrt(jnp.float32(feat))
    weight = jax.random.uniform(k_w, (feat, feat), dtype=jnp.float32,
                                minval=-bound, maxval=bound)
    bias = jax.random.uniform(k_b, (feat,), dtype=jnp.float32,
                              minval=-bound, maxval=bound)

    out = dynamic_net_forward(x, weight, bias, iterations)
    out = jax.block_until_ready(out)
    ref = _reference(x, weight, bias, iterations)
    assert out.shape == (batch, feat)
    assert jnp.allclose(out, ref, atol=1e-5, rtol=1e-5), "mismatch vs reference"

    # Exercise the ragged-batch, multi-tile grid and fori_loop (iterations > 8) paths.
    x2 = jax.random.normal(jax.random.PRNGKey(1), (200, feat), dtype=jnp.float32)
    out2 = jax.block_until_ready(dynamic_net_forward(x2, weight, bias, 12))
    ref2 = _reference(x2, weight, bias, 12)
    assert out2.shape == (200, feat)
    assert jnp.allclose(out2, ref2, atol=1e-5, rtol=1e-5), "mismatch vs reference (case 2)"

    print("KERNEL_OK")
</pallas_src>

<mosaic_0001>
module attributes {stable_mosaic.version = 11 : i64} {
  func.func @_dynamic_net_kernel(%arg0: i32, %arg1: memref<8x128xf32, #tpu.memory_space<vmem>>, %arg2: memref<128x128xf32, #tpu.memory_space<vmem>>, %arg3: memref<1x128xf32, #tpu.memory_space<vmem>>, %arg4: memref<8x128xf32, #tpu.memory_space<vmem>>) attributes {dimension_semantics = [#tpu.dimension_semantics<parallel>], iteration_bounds = array<i64: 1>, scalar_prefetch = 0 : i64, scratch_operands = 0 : i64, tpu.core_type = #tpu.core_type<tc>, window_params = [{transform_indices = @transform_0, window_bounds = array<i64: 8, 128>}, {pipeline_mode = #tpu.pipeline_mode<synchronous>, transform_indices = @transform_1, window_bounds = array<i64: 128, 128>}, {pipeline_mode = #tpu.pipeline_mode<synchronous>, transform_indices = @transform_2, window_bounds = array<i64: 1, 128>}, {transform_indices = @transform_3, window_bounds = array<i64: 8, 128>}]} {
    %c0 = arith.constant 0 : index
    %c0_0 = arith.constant 0 : index
    %0 = vector.load %arg1[%c0, %c0_0] : memref<8x128xf32, #tpu.memory_space<vmem>>, vector<8x128xf32>
    %c0_1 = arith.constant 0 : index
    %c0_2 = arith.constant 0 : index
    %1 = vector.load %arg2[%c0_1, %c0_2] : memref<128x128xf32, #tpu.memory_space<vmem>>, vector<128x128xf32>
    %c0_3 = arith.constant 0 : index
    %c0_4 = arith.constant 0 : index
    %2 = vector.load %arg3[%c0_3, %c0_4] : memref<1x128xf32, #tpu.memory_space<vmem>>, vector<1x128xf32>
    %cst = arith.constant dense<0.000000e+00> : vector<8x128xf32>
    %3 = tpu.matmul %0, %1, %cst {dimension_numbers = #tpu.dot_dimension_numbers<[1], [0], [0], [1], [0, 0, 1, 1], [], []>} : vector<8x128xf32>, vector<128x128xf32>, vector<8x128xf32> -> vector<8x128xf32>
    %4 = vector.broadcast %2 : vector<1x128xf32> to vector<8x128xf32>
    %5 = arith.addf %3, %4 : vector<8x128xf32>
    %6 = math.tanh %5 : vector<8x128xf32>
    %cst_5 = arith.constant dense<0.000000e+00> : vector<8x128xf32>
    %7 = tpu.matmul %6, %1, %cst_5 {dimension_numbers = #tpu.dot_dimension_numbers<[1], [0], [0], [1], [0, 0, 1, 1], [], []>} : vector<8x128xf32>, vector<128x128xf32>, vector<8x128xf32> -> vector<8x128xf32>
    %8 = vector.broadcast %2 : vector<1x128xf32> to vector<8x128xf32>
    %9 = arith.addf %7, %8 : vector<8x128xf32>
    %10 = math.tanh %9 : vector<8x128xf32>
    %cst_6 = arith.constant dense<0.000000e+00> : vector<8x128xf32>
    %11 = tpu.matmul %10, %1, %cst_6 {dimension_numbers = #tpu.dot_dimension_numbers<[1], [0], [0], [1], [0, 0, 1, 1], [], []>} : vector<8x128xf32>, vector<128x128xf32>, vector<8x128xf32> -> vector<8x128xf32>
    %12 = vector.broadcast %2 : vector<1x128xf32> to vector<8x128xf32>
    %13 = arith.addf %11, %12 : vector<8x128xf32>
    %14 = math.tanh %13 : vector<8x128xf32>
    %cst_7 = arith.constant dense<0.000000e+00> : vector<8x128xf32>
    %15 = tpu.matmul %14, %1, %cst_7 {dimension_numbers = #tpu.dot_dimension_numbers<[1], [0], [0], [1], [0, 0, 1, 1], [], []>} : vector<8x128xf32>, vector<128x128xf32>, vector<8x128xf32> -> vector<8x128xf32>
    %16 = vector.broadcast %2 : vector<1x128xf32> to vector<8x128xf32>
    %17 = arith.addf %15, %16 : vector<8x128xf32>
    %18 = math.tanh %17 : vector<8x128xf32>
    %cst_8 = arith.constant dense<0.000000e+00> : vector<8x128xf32>
    %19 = tpu.matmul %18, %1, %cst_8 {dimension_numbers = #tpu.dot_dimension_numbers<[1], [0], [0], [1], [0, 0, 1, 1], [], []>} : vector<8x128xf32>, vector<128x128xf32>, vector<8x128xf32> -> vector<8x128xf32>
    %20 = vector.broadcast %2 : vector<1x128xf32> to vector<8x128xf32>
    %21 = arith.addf %19, %20 : vector<8x128xf32>
    %22 = math.tanh %21 : vector<8x128xf32>
    %c0_9 = arith.constant 0 : index
    %c0_10 = arith.constant 0 : index
    %23 = vector.load %arg4[%c0_9, %c0_10] : memref<8x128xf32, #tpu.memory_space<vmem>>, vector<8x128xf32>
    tpu.vector_store %arg4[%c0_9, %c0_10], %22 {strides = array<i32>} : memref<8x128xf32, #tpu.memory_space<vmem>>, vector<8x128xf32>,
    return
  }
  func.func @transform_0(%arg0: i32) -> (i32, i32) {
    %c0_i32 = arith.constant 0 : i32
    %c0_i32_0 = arith.constant 0 : i32
    return %arg0, %c0_i32 : i32, i32
  }
  func.func @transform_1(%arg0: i32) -> (i32, i32) {
    %c0_i32 = arith.constant 0 : i32
    %c0_i32_0 = arith.constant 0 : i32
    %c0_i32_1 = arith.constant 0 : i32
    return %c0_i32, %c0_i32_0 : i32, i32
  }
  func.func @transform_2(%arg0: i32) -> (i32, i32) {
    %c0_i32 = arith.constant 0 : i32
    %c0_i32_0 = arith.constant 0 : i32
    %c0_i32_1 = arith.constant 0 : i32
    return %c0_i32, %c0_i32_0 : i32, i32
  }
  func.func @transform_3(%arg0: i32) -> (i32, i32) {
    %c0_i32 = arith.constant 0 : i32
    %c0_i32_0 = arith.constant 0 : i32
    return %arg0, %c0_i32 : i32, i32
  }
}

</mosaic_0001>

<llo_original>
// kernel: tpu_custom_call.1
$region0: #{tpu_custom_call.1}
  #allocation0 [shape = 'u32[]', space=smem, size = 0x4, offset = 0x4, fixed_abs, tag = 'smem constant byte address 0x4 - core index']
  #allocation1 [shape = 'u32[144,128]{1,0:T(1,128)}', space=vmem, size = 0x12000, scoped, tag = 'internal scratch']
  %s0 = inlined_call_operand.hbm [shape: f32[8,128], index: 0, kind: input, shape index: {}]
  %s1 = inlined_call_operand.hbm [shape: f32[128,128], index: 1, kind: input, shape index: {}]
  %s2 = inlined_call_operand.vmem [shape: f32[1,128], index: 2, kind: input, shape index: {}]
  %s3 = inlined_call_operand.hbm [shape: f32[8,128], index: 3, kind: output, shape index: {}]
  %s4 = sld [smem:[#allocation0]]
  $region30: #{tpu_custom_call.1} parent=0
    _
  %s6 = ssub.s32 1, %s4
  %s7 = scalar_select 0, %s6, %s4
  $region1: #{tpu_custom_call.1} parent=0
    #allocation2 [shape = 'u8[4096]{0}', space=vmem, size = 0x1000, scoped, tag = 'input window, operand 0, single buffered']
    #allocation3 [shape = 's32[1]{0}', space=sflag, size = 0x4, scoped, tag = 'scoped memory for tpu_custom_call.1']
    #allocation4 [shape = 's32[1]{0}', space=sflag, size = 0x4, scoped, tag = 'scoped memory for tpu_custom_call.1']
    #allocation5 [shape = 'u8[65536]{0}', space=vmem, size = 0x10000, scoped, tag = 'input window, operand 1, single buffered']
    #allocation6 [shape = 's32[1]{0}', space=sflag, size = 0x4, scoped, tag = 'scoped memory for tpu_custom_call.1']
    #allocation7 [shape = 'u8[4096]{0}', space=vmem, size = 0x1000, scoped, tag = 'output window, operand 0, single buffered']
    %8 = vsyncpa [#allocation3], 0
    %9 = vsyncpa [#allocation6], 0
    %10 = vsyncpa [#allocation4], 0
    // Predicated region
    $region2: #{tpu_custom_call.1} parent=1 // pred_check
      _
    $region3: #{tpu_custom_call.1} parent=1 // pred_check_branch
      %12 = sbr.rel (0) target = $region5
    $region4: #{tpu_custom_call.1} parent=1 // pred_region
      %s14 = ssub.s32 128, 128
      %15 = vsyncadd [#allocation3], %s14
      %s17 = sshll.u32 [#allocation2], 4
      %s18 = int_to_ptr.vmem [resolvable:$true] %s17
      %20 = dma.hbm_to_vmem [thread:$0]  %s0, 128, %s18, [#allocation3]
    $region5: #{tpu_custom_call.1} parent=1 // pred_fallthru
      _
    // Predicated region
    $region6: #{tpu_custom_call.1} parent=1 // pred_check
      _
    $region7: #{tpu_custom_call.1} parent=1 // pred_check_branch
      %22 = sbr.rel (0) target = $region9
    $region8: #{tpu_custom_call.1} parent=1 // pred_region
      %s24 = ssub.s32 2048, 2048
      %25 = vsyncadd [#allocation6], %s24
      %s26 = sshll.u32 [#allocation5], 4
      %s27 = int_to_ptr.vmem [resolvable:$true] %s26
      %32 = dma.hbm_to_vmem [thread:$0]  %s1, 2048, %s27, [#allocation6], 128, 128, 8
    $region9: #{tpu_custom_call.1} parent=1 // pred_fallthru
      _
    // Predicated region
    $region10: #{tpu_custom_call.1} parent=1 // pred_check
      _
    $region11: #{tpu_custom_call.1} parent=1 // pred_check_branch
      %34 = sbr.rel (0) target = $region13
    $region12: #{tpu_custom_call.1} parent=1 // pred_region
      _
    $region13: #{tpu_custom_call.1} parent=1 // pred_fallthru
      _
    // Predicated region
    $region14: #{tpu_custom_call.1} parent=1 // pred_check
      _
    $region15: #{tpu_custom_call.1} parent=1 // pred_check_branch
      %36 = sbr.rel (0) target = $region17
    $region16: #{tpu_custom_call.1} parent=1 // pred_region
      %37 = dma.done [#allocation3], 128
    $region17: #{tpu_custom_call.1} parent=1 // pred_fallthru
      _
    // Predicated region
    $region18: #{tpu_custom_call.1} parent=1 // pred_check
      _
    $region19: #{tpu_custom_call.1} parent=1 // pred_check_branch
      %39 = sbr.rel (0) target = $region21
    $region20: #{tpu_custom_call.1} parent=1 // pred_region
      %40 = dma.done [#allocation6], 2048
    $region21: #{tpu_custom_call.1} parent=1 // pred_fallthru
      _
    %v41 = vld [vmem:[#allocation2] sm:$0xff]
    %v42 = vld [vmem:[#allocation5] sm:$0xff]
    %v43 = vld [vmem:[#allocation5 + $0x8] sm:$0xff]
    %v44 = vld [vmem:[#allocation5 + $0x10] sm:$0xff]
    %v45 = vld [vmem:[#allocation5 + $0x18] sm:$0xff]
    %v46 = vld [vmem:[#allocation5 + $0x20] sm:$0xff]
    %v47 = vld [vmem:[#allocation5 + $0x28] sm:$0xff]
    %v48 = vld [vmem:[#allocation5 + $0x30] sm:$0xff]
    %v49 = vld [vmem:[#allocation5 + $0x38] sm:$0xff]
    %v50 = vld [vmem:[#allocation5 + $0x40] sm:$0xff]
    %v51 = vld [vmem:[#allocation5 + $0x48] sm:$0xff]
    %v52 = vld [vmem:[#allocation5 + $0x50] sm:$0xff]
    %v53 = vld [vmem:[#allocation5 + $0x58] sm:$0xff]
    %v54 = vld [vmem:[#allocation5 + $0x60] sm:$0xff]
    %v55 = vld [vmem:[#allocation5 + $0x68] sm:$0xff]
    %v56 = vld [vmem:[#allocation5 + $0x70] sm:$0xff]
    %v57 = vld [vmem:[#allocation5 + $0x78] sm:$0xff]
    %v58 = vld [vmem:[%s2] sm:$0x1]
    %v60 = vlaneseq
    %v61 = vshrl.u32 %v60, 7
    %v62 = vsub.s32 0, %v61
    %v63 = vrot.slane %v58, %v62
    %65 = vmatprep.subr.mxu0 0.0
    %66 = vmatpush1.msra.mxu0 %v42
    %67 = vmatprep.subr.mxu0 0.0
    %68 = vmatpush1.msra.mxu0 %v43
    %69 = vmatprep.subr.mxu0 0.0
    %70 = vmatpush1.msra.mxu0 %v44
    %71 = vmatprep.subr.mxu0 0.0
    %72 = vmatpush1.msra.mxu0 %v45
    %73 = vmatprep.subr.mxu0 0.0
    %74 = vmatpush1.msra.mxu0 %v46
    %75 = vmatprep.subr.mxu0 0.0
    %76 = vmatpush1.msra.mxu0 %v47
    %77 = vmatprep.subr.mxu0 0.0
    %78 = vmatpush1.msra.mxu0 %v48
    %79 = vmatprep.subr.mxu0 0.0
    %80 = vmatpush1.msra.mxu0 %v49
    %81 = vmatprep.subr.mxu0 0.0
    %82 = vmatpush1.msra.mxu0 %v50
    %83 = vmatprep.subr.mxu0 0.0
    %84 = vmatpush1.msra.mxu0 %v51
    %85 = vmatprep.subr.mxu0 0.0
    %86 = vmatpush1.msra.mxu0 %v52
    %87 = vmatprep.subr.mxu0 0.0
    %88 = vmatpush1.msra.mxu0 %v53
    %89 = vmatprep.subr.mxu0 0.0
    %90 = vmatpush1.msra.mxu0 %v54
    %91 = vmatprep.subr.mxu0 0.0
    %92 = vmatpush1.msra.mxu0 %v55
    %93 = vmatprep.subr.mxu0 0.0
    %94 = vmatpush1.msra.mxu0 %v56
    %95 = vmatprep.subr.mxu0 0.0
    %96 = vmatpush1.msra.mxu0 %v57
    %97 = vmatprep.subr.mxu0 0.0
    %98 = vmatpush1.msra.mxu0 0.0
    %99 = vmatprep.subr.mxu0 0.0
    %100 = vmatpush1.msra.mxu0 0.0
    %101 = vmatprep.subr.mxu0 0.0
    %102 = vmatpush1.msra.mxu0 0.0
    %103 = vmatprep.subr.mxu0 0.0
    %104 = vmatpush1.msra.mxu0 0.0
    %105 = vmatprep.subr.mxu0 0.0
    %106 = vmatpush1.msra.mxu0 0.0
    %107 = vmatprep.subr.mxu0 0.0
    %108 = vmatpush1.msra.mxu0 0.0
    %109 = vmatprep.subr.mxu0 0.0
    %110 = vmatpush1.msra.mxu0 0.0
    %111 = vmatprep.subr.mxu0 0.0
    %112 = vmatpush1.msra.mxu0 0.0
    %113 = vmatprep.subr.mxu0 0.0
    %114 = vmatpush1.msra.mxu0 0.0
    %115 = vmatprep.subr.mxu0 0.0
    %116 = vmatpush1.msra.mxu0 0.0
    %117 = vmatprep.subr.mxu0 0.0
    %118 = vmatpush1.msra.mxu0 0.0
    %119 = vmatprep.subr.mxu0 0.0
    %120 = vmatpush1.msra.mxu0 0.0
    %121 = vmatprep.subr.mxu0 0.0
    %122 = vmatpush1.msra.mxu0 0.0
    %123 = vmatprep.subr.mxu0 0.0
    %124 = vmatpush1.msra.mxu0 0.0
    %125 = vmatprep.subr.mxu0 0.0
    %126 = vmatpush1.msra.mxu0 0.0
    %127 = vmatprep.subr.mxu0 0.0
    %128 = vmatpush1.msra.mxu0 0.0
    %129 = vmatprep.mubr.f32.mxu0 0.0
    %130 = vmatmul.mubr.f32.gmra.mrb[0].mxu0 %v41
    %v131 = vpop.f32.mrb[0].mxu0
    %v132 = vadd.f32 %v63, %v131
    %v133 = vpop.f32.mrb[0].mxu0
    %134 = vdwg.mxu0
    %v135 = vtanh.pop %v132
    %136 = vmatprep.subr.mxu0 0.0
    %137 = vmatpush1.msra.mxu0 %v42
    %138 = vmatprep.subr.mxu0 0.0
    %139 = vmatpush1.msra.mxu0 %v43
    %140 = vmatprep.subr.mxu0 0.0
    %141 = vmatpush1.msra.mxu0 %v44
    %142 = vmatprep.subr.mxu0 0.0
    %143 = vmatpush1.msra.mxu0 %v45
    %144 = vmatprep.subr.mxu0 0.0
    %145 = vmatpush1.msra.mxu0 %v46
    %146 = vmatprep.subr.mxu0 0.0
    %147 = vmatpush1.msra.mxu0 %v47
    %148 = vmatprep.subr.mxu0 0.0
    %149 = vmatpush1.msra.mxu0 %v48
    %150 = vmatprep.subr.mxu0 0.0
    %151 = vmatpush1.msra.mxu0 %v49
    %152 = vmatprep.subr.mxu0 0.0
    %153 = vmatpush1.msra.mxu0 %v50
    %154 = vmatprep.subr.mxu0 0.0
    %155 = vmatpush1.msra.mxu0 %v51
    %156 = vmatprep.subr.mxu0 0.0
    %157 = vmatpush1.msra.mxu0 %v52
    %158 = vmatprep.subr.mxu0 0.0
    %159 = vmatpush1.msra.mxu0 %v53
    %160 = vmatprep.subr.mxu0 0.0
    %161 = vmatpush1.msra.mxu0 %v54
    %162 = vmatprep.subr.mxu0 0.0
    %163 = vmatpush1.msra.mxu0 %v55
    %164 = vmatprep.subr.mxu0 0.0
    %165 = vmatpush1.msra.mxu0 %v56
    %166 = vmatprep.subr.mxu0 0.0
    %167 = vmatpush1.msra.mxu0 %v57
    %168 = vmatprep.subr.mxu0 0.0
    %169 = vmatpush1.msra.mxu0 0.0
    %170 = vmatprep.subr.mxu0 0.0
    %171 = vmatpush1.msra.mxu0 0.0
    %172 = vmatprep.subr.mxu0 0.0
    %173 = vmatpush1.msra.mxu0 0.0
    %174 = vmatprep.subr.mxu0 0.0
    %175 = vmatpush1.msra.mxu0 0.0
    %176 = vmatprep.subr.mxu0 0.0
    %177 = vmatpush1.msra.mxu0 0.0
    %178 = vmatprep.subr.mxu0 0.0
    %179 = vmatpush1.msra.mxu0 0.0
    %180 = vmatprep.subr.mxu0 0.0
    %181 = vmatpush1.msra.mxu0 0.0
    %182 = vmatprep.subr.mxu0 0.0
    %183 = vmatpush1.msra.mxu0 0.0
    %184 = vmatprep.subr.mxu0 0.0
    %185 = vmatpush1.msra.mxu0 0.0
    %186 = vmatprep.subr.mxu0 0.0
    %187 = vmatpush1.msra.mxu0 0.0
    %188 = vmatprep.subr.mxu0 0.0
    %189 = vmatpush1.msra.mxu0 0.0
    %190 = vmatprep.subr.mxu0 0.0
    %191 = vmatpush1.msra.mxu0 0.0
    %192 = vmatprep.subr.mxu0 0.0
    %193 = vmatpush1.msra.mxu0 0.0
    %194 = vmatprep.subr.mxu0 0.0
    %195 = vmatpush1.msra.mxu0 0.0
    %196 = vmatprep.subr.mxu0 0.0
    %197 = vmatpush1.msra.mxu0 0.0
    %198 = vmatprep.subr.mxu0 0.0
    %199 = vmatpush1.msra.mxu0 0.0
    %200 = vmatprep.mubr.f32.mxu0 0.0
    %201 = vmatmul.mubr.f32.gmra.mrb[0].mxu0 %v135
    %v202 = vpop.f32.mrb[0].mxu0
    %v203 = vadd.f32 %v63, %v202
    %v204 = vpop.f32.mrb[0].mxu0
    %205 = vdwg.mxu0
    %v206 = vtanh.pop %v203
    %207 = vmatprep.subr.mxu0 0.0
    %208 = vmatpush1.msra.mxu0 %v42
    %209 = vmatprep.subr.mxu0 0.0
    %210 = vmatpush1.msra.mxu0 %v43
    %211 = vmatprep.subr.mxu0 0.0
    %212 = vmatpush1.msra.mxu0 %v44
    %213 = vmatprep.subr.mxu0 0.0
    %214 = vmatpush1.msra.mxu0 %v45
    %215 = vmatprep.subr.mxu0 0.0
    %216 = vmatpush1.msra.mxu0 %v46
    %217 = vmatprep.subr.mxu0 0.0
    %218 = vmatpush1.msra.mxu0 %v47
    %219 = vmatprep.subr.mxu0 0.0
    %220 = vmatpush1.msra.mxu0 %v48
    %221 = vmatprep.subr.mxu0 0.0
    %222 = vmatpush1.msra.mxu0 %v49
    %223 = vmatprep.subr.mxu0 0.0
    %224 = vmatpush1.msra.mxu0 %v50
    %225 = vmatprep.subr.mxu0 0.0
    %226 = vmatpush1.msra.mxu0 %v51
    %227 = vmatprep.subr.mxu0 0.0
    %228 = vmatpush1.msra.mxu0 %v52
    %229 = vmatprep.subr.mxu0 0.0
    %230 = vmatpush1.msra.mxu0 %v53
    %231 = vmatprep.subr.mxu0 0.0
    %232 = vmatpush1.msra.mxu0 %v54
    %233 = vmatprep.subr.mxu0 0.0
    %234 = vmatpush1.msra.mxu0 %v55
    %235 = vmatprep.subr.mxu0 0.0
    %236 = vmatpush1.msra.mxu0 %v56
    %237 = vmatprep.subr.mxu0 0.0
    %238 = vmatpush1.msra.mxu0 %v57
    %239 = vmatprep.subr.mxu0 0.0
    %240 = vmatpush1.msra.mxu0 0.0
    %241 = vmatprep.subr.mxu0 0.0
    %242 = vmatpush1.msra.mxu0 0.0
    %243 = vmatprep.subr.mxu0 0.0
    %244 = vmatpush1.msra.mxu0 0.0
    %245 = vmatprep.subr.mxu0 0.0
    %246 = vmatpush1.msra.mxu0 0.0
    %247 = vmatprep.subr.mxu0 0.0
    %248 = vmatpush1.msra.mxu0 0.0
    %249 = vmatprep.subr.mxu0 0.0
    %250 = vmatpush1.msra.mxu0 0.0
    %251 = vmatprep.subr.mxu0 0.0
    %252 = vmatpush1.msra.mxu0 0.0
    %253 = vmatprep.subr.mxu0 0.0
    %254 = vmatpush1.msra.mxu0 0.0
    %255 = vmatprep.subr.mxu0 0.0
    %256 = vmatpush1.msra.mxu0 0.0
    %257 = vmatprep.subr.mxu0 0.0
    %258 = vmatpush1.msra.mxu0 0.0
    %259 = vmatprep.subr.mxu0 0.0
    %260 = vmatpush1.msra.mxu0 0.0
    %261 = vmatprep.subr.mxu0 0.0
    %262 = vmatpush1.msra.mxu0 0.0
    %263 = vmatprep.subr.mxu0 0.0
    %264 = vmatpush1.msra.mxu0 0.0
    %265 = vmatprep.subr.mxu0 0.0
    %266 = vmatpush1.msra.mxu0 0.0
    %267 = vmatprep.subr.mxu0 0.0
    %268 = vmatpush1.msra.mxu0 0.0
    %269 = vmatprep.subr.mxu0 0.0
    %270 = vmatpush1.msra.mxu0 0.0
    %271 = vmatprep.mubr.f32.mxu0 0.0
    %272 = vmatmul.mubr.f32.gmra.mrb[0].mxu0 %v206
    %v273 = vpop.f32.mrb[0].mxu0
    %v274 = vadd.f32 %v63, %v273
    %v275 = vpop.f32.mrb[0].mxu0
    %276 = vdwg.mxu0
    %v277 = vtanh.pop %v274
    %278 = vmatprep.subr.mxu0 0.0
    %279 = vmatpush1.msra.mxu0 %v42
    %280 = vmatprep.subr.mxu0 0.0
    %281 = vmatpush1.msra.mxu0 %v43
    %282 = vmatprep.subr.mxu0 0.0
    %283 = vmatpush1.msra.mxu0 %v44
    %284 = vmatprep.subr.mxu0 0.0
    %285 = vmatpush1.msra.mxu0 %v45
    %286 = vmatprep.subr.mxu0 0.0
    %287 = vmatpush1.msra.mxu0 %v46
    %288 = vmatprep.subr.mxu0 0.0
    %289 = vmatpush1.msra.mxu0 %v47
    %290 = vmatprep.subr.mxu0 0.0
    %291 = vmatpush1.msra.mxu0 %v48
    %292 = vmatprep.subr.mxu0 0.0
    %293 = vmatpush1.msra.mxu0 %v49
    %294 = vmatprep.subr.mxu0 0.0
    %295 = vmatpush1.msra.mxu0 %v50
    %296 = vmatprep.subr.mxu0 0.0
    %297 = vmatpush1.msra.mxu0 %v51
    %298 = vmatprep.subr.mxu0 0.0
    %299 = vmatpush1.msra.mxu0 %v52
    %300 = vmatprep.subr.mxu0 0.0
    %301 = vmatpush1.msra.mxu0 %v53
    %302 = vmatprep.subr.mxu0 0.0
    %303 = vmatpush1.msra.mxu0 %v54
    %304 = vmatprep.subr.mxu0 0.0
    %305 = vmatpush1.msra.mxu0 %v55
    %306 = vmatprep.subr.mxu0 0.0
    %307 = vmatpush1.msra.mxu0 %v56
    %308 = vmatprep.subr.mxu0 0.0
    %309 = vmatpush1.msra.mxu0 %v57
    %310 = vmatprep.subr.mxu0 0.0
    %311 = vmatpush1.msra.mxu0 0.0
    %312 = vmatprep.subr.mxu0 0.0
    %313 = vmatpush1.msra.mxu0 0.0
    %314 = vmatprep.subr.mxu0 0.0
    %315 = vmatpush1.msra.mxu0 0.0
    %316 = vmatprep.subr.mxu0 0.0
    %317 = vmatpush1.msra.mxu0 0.0
    %318 = vmatprep.subr.mxu0 0.0
    %319 = vmatpush1.msra.mxu0 0.0
    %320 = vmatprep.subr.mxu0 0.0
    %321 = vmatpush1.msra.mxu0 0.0
    %322 = vmatprep.subr.mxu0 0.0
    %323 = vmatpush1.msra.mxu0 0.0
    %324 = vmatprep.subr.mxu0 0.0
    %325 = vmatpush1.msra.mxu0 0.0
    %326 = vmatprep.subr.mxu0 0.0
    %327 = vmatpush1.msra.mxu0 0.0
    %328 = vmatprep.subr.mxu0 0.0
    %329 = vmatpush1.msra.mxu0 0.0
    %330 = vmatprep.subr.mxu0 0.0
    %331 = vmatpush1.msra.mxu0 0.0
    %332 = vmatprep.subr.mxu0 0.0
    %333 = vmatpush1.msra.mxu0 0.0
    %334 = vmatprep.subr.mxu0 0.0
    %335 = vmatpush1.msra.mxu0 0.0
    %336 = vmatprep.subr.mxu0 0.0
    %337 = vmatpush1.msra.mxu0 0.0
    %338 = vmatprep.subr.mxu0 0.0
    %339 = vmatpush1.msra.mxu0 0.0
    %340 = vmatprep.subr.mxu0 0.0
    %341 = vmatpush1.msra.mxu0 0.0
    %342 = vmatprep.mubr.f32.mxu0 0.0
    %343 = vmatmul.mubr.f32.gmra.mrb[0].mxu0 %v277
    %v344 = vpop.f32.mrb[0].mxu0
    %v345 = vadd.f32 %v63, %v344
    %v346 = vpop.f32.mrb[0].mxu0
    %347 = vdwg.mxu0
    %v348 = vtanh.pop %v345
    %349 = vmatprep.subr.mxu0 0.0
    %350 = vmatpush1.msra.mxu0 %v42
    %351 = vmatprep.subr.mxu0 0.0
    %352 = vmatpush1.msra.mxu0 %v43
    %353 = vmatprep.subr.mxu0 0.0
    %354 = vmatpush1.msra.mxu0 %v44
    %355 = vmatprep.subr.mxu0 0.0
    %356 = vmatpush1.msra.mxu0 %v45
    %357 = vmatprep.subr.mxu0 0.0
    %358 = vmatpush1.msra.mxu0 %v46
    %359 = vmatprep.subr.mxu0 0.0
    %360 = vmatpush1.msra.mxu0 %v47
    %361 = vmatprep.subr.mxu0 0.0
    %362 = vmatpush1.msra.mxu0 %v48
    %363 = vmatprep.subr.mxu0 0.0
    %364 = vmatpush1.msra.mxu0 %v49
    %365 = vmatprep.subr.mxu0 0.0
    %366 = vmatpush1.msra.mxu0 %v50
    %367 = vmatprep.subr.mxu0 0.0
    %368 = vmatpush1.msra.mxu0 %v51
    %369 = vmatprep.subr.mxu0 0.0
    %370 = vmatpush1.msra.mxu0 %v52
    %371 = vmatprep.subr.mxu0 0.0
    %372 = vmatpush1.msra.mxu0 %v53
    %373 = vmatprep.subr.mxu0 0.0
    %374 = vmatpush1.msra.mxu0 %v54
    %375 = vmatprep.subr.mxu0 0.0
    %376 = vmatpush1.msra.mxu0 %v55
    %377 = vmatprep.subr.mxu0 0.0
    %378 = vmatpush1.msra.mxu0 %v56
    %379 = vmatprep.subr.mxu0 0.0
    %380 = vmatpush1.msra.mxu0 %v57
    %381 = vmatprep.subr.mxu0 0.0
    %382 = vmatpush1.msra.mxu0 0.0
    %383 = vmatprep.subr.mxu0 0.0
    %384 = vmatpush1.msra.mxu0 0.0
    %385 = vmatprep.subr.mxu0 0.0
    %386 = vmatpush1.msra.mxu0 0.0
    %387 = vmatprep.subr.mxu0 0.0
    %388 = vmatpush1.msra.mxu0 0.0
    %389 = vmatprep.subr.mxu0 0.0
    %390 = vmatpush1.msra.mxu0 0.0
    %391 = vmatprep.subr.mxu0 0.0
    %392 = vmatpush1.msra.mxu0 0.0
    %393 = vmatprep.subr.mxu0 0.0
    %394 = vmatpush1.msra.mxu0 0.0
    %395 = vmatprep.subr.mxu0 0.0
    %396 = vmatpush1.msra.mxu0 0.0
    %397 = vmatprep.subr.mxu0 0.0
    %398 = vmatpush1.msra.mxu0 0.0
    %399 = vmatprep.subr.mxu0 0.0
    %400 = vmatpush1.msra.mxu0 0.0
    %401 = vmatprep.subr.mxu0 0.0
    %402 = vmatpush1.msra.mxu0 0.0
    %403 = vmatprep.subr.mxu0 0.0
    %404 = vmatpush1.msra.mxu0 0.0
    %405 = vmatprep.subr.mxu0 0.0
    %406 = vmatpush1.msra.mxu0 0.0
    %407 = vmatprep.subr.mxu0 0.0
    %408 = vmatpush1.msra.mxu0 0.0
    %409 = vmatprep.subr.mxu0 0.0
    %410 = vmatpush1.msra.mxu0 0.0
    %411 = vmatprep.subr.mxu0 0.0
    %412 = vmatpush1.msra.mxu0 0.0
    %413 = vmatprep.mubr.f32.mxu0 0.0
    %414 = vmatmul.mubr.f32.gmra.mrb[0].mxu0 %v348
    %v415 = vpop.f32.mrb[0].mxu0
    %v416 = vadd.f32 %v63, %v415
    %v417 = vpop.f32.mrb[0].mxu0
    %418 = vdwg.mxu0
    %v419 = vtanh.pop %v416
    %420 = vst [vmem:[#allocation7] sm:$0xff] %v419
    // Predicated region
    $region22: #{tpu_custom_call.1} parent=1 // pred_check
      _
    $region23: #{tpu_custom_call.1} parent=1 // pred_check_branch
      %422 = sbr.rel (0) target = $region25
    $region24: #{tpu_custom_call.1} parent=1 // pred_region
      %s424 = ssub.s32 128, 128
      %425 = vsyncadd [#allocation4], %s424
      %s427 = sshll.u32 [#allocation7], 4
      %s428 = int_to_ptr.vmem [resolvable:$true] %s427
      %430 = dma.vmem_to_hbm [thread:$0]  %s428, 128, %s3, [#allocation4]
    $region25: #{tpu_custom_call.1} parent=1 // pred_fallthru
      _
    // Predicated region
    $region26: #{tpu_custom_call.1} parent=1 // pred_check
      _
    $region27: #{tpu_custom_call.1} parent=1 // pred_check_branch
      %432 = sbr.rel (0) target = $region29
    $region28: #{tpu_custom_call.1} parent=1 // pred_region
      %433 = dma.done [#allocation4], 128
    $region29: #{tpu_custom_call.1} parent=1 // pred_fallthru
      _
    %434 = vsyncpa [#allocation3], 1
    %435 = vsyncpa [#allocation6], 1
    %436 = vsyncpa [#allocation4], 1

</llo_original>
